<compile_context>
chip_gen: v6e
topology: v6e:2x2x1
jax: 0.10.0
libtpu: 0.0.40
codegen_flags: <defaults>
</compile_context>

<pallas_src>
import functools

import jax
import jax.numpy as jnp
from jax import lax
from jax.experimental import pallas as pl
from jax.experimental.pallas import tpu as pltpu

EPS = 1e-5


def _conv_relu_stats_kernel(w_ref, x_ref, b_ref, y_ref, sum_ref, sq_ref, *,
                            tm, m_valid, m_padded):
    # [Cout, K] @ [K, TM] on the MXU, f32 accumulation.
    y = jnp.dot(w_ref[...], x_ref[...], preferred_element_type=jnp.float32)
    y = jnp.maximum(y + b_ref[...], 0.0)            # bias + ReLU, f32
    y_ref[...] = y

    if m_padded > m_valid:
        # Zero out padded columns so they don't pollute the batch statistics.
        col = pl.program_id(0) * tm + lax.broadcasted_iota(jnp.int32, y.shape, 1)
        y = jnp.where(col < m_valid, y, 0.0)

    # Per-tile partial stats (single sweep: sum and sum-of-squares).
    sum_ref[0] = jnp.sum(y, axis=1, keepdims=True)       # [Cout, 1]
    sq_ref[0] = jnp.sum(y * y, axis=1, keepdims=True)    # [Cout, 1]


def _bn_apply_kernel(y_ref, scale_ref, shift_ref, o_ref):
    # Per-channel affine already folded: out = y * scale + shift.
    o_ref[...] = y_ref[...] * scale_ref[...] + shift_ref[...]


def encoder_block_forward(x, w, b, gamma, beta):
    """x: [N, Cin, H, W] f32; w: [Cout, Cin, 4, 4]; b, gamma, beta: [Cout]."""
    N, Cin, H, W = x.shape
    Cout, _, KH, KW = w.shape
    SH = SW = 2
    PH = PW = 1
    Ho = (H + 2 * PH - KH) // SH + 1
    Wo = (W + 2 * PW - KW) // SW + 1
    K = Cin * KH * KW
    M = N * Ho * Wo

    # ---- glue: im2col directly into transposed [K, M] layout, bf16 ----
    xp = jnp.pad(x, ((0, 0), (0, 0), (PH, PH), (PW, PW)))
    taps = []
    for kh in range(KH):
        for kw in range(KW):
            taps.append(xp[:, :, kh:kh + SH * Ho:SH, kw:kw + SW * Wo:SW])
    patches = jnp.stack(taps, axis=0)                # [KH*KW, N, Cin, Ho, Wo]
    patches = patches.transpose(2, 0, 1, 3, 4)       # [Cin, KH*KW, N, Ho, Wo]
    Xt = patches.reshape(K, M).astype(jnp.bfloat16)  # rows (ci,kh,kw), cols (n,ho,wo)
    Wt = w.reshape(Cout, K).astype(jnp.bfloat16)

    # ---- tiling over M (lane axis) ----
    TM = min(1024, pl.cdiv(M, 128) * 128)            # lane-dense tile width
    M_pad = pl.cdiv(M, TM) * TM
    if M_pad > M:
        Xt = jnp.pad(Xt, ((0, 0), (0, M_pad - M)))
    num_tiles = M_pad // TM

    cparams = pltpu.CompilerParams(
        dimension_semantics=("parallel",),           # megacore sharding on v7x
        vmem_limit_bytes=32 * 1024 * 1024,           # safe on v7x's 64 MiB VMEM
    )

    b2 = b.reshape(Cout, 1).astype(jnp.float32)

    # ---- pass 1: conv (matmul) + bias + ReLU + per-tile partial BN stats ----
    kern1 = functools.partial(_conv_relu_stats_kernel,
                              tm=TM, m_valid=M, m_padded=M_pad)
    y_full, part_sum, part_sq = pl.pallas_call(
        kern1,
        out_shape=(
            jax.ShapeDtypeStruct((Cout, M_pad), jnp.float32),
            jax.ShapeDtypeStruct((num_tiles, Cout, 1), jnp.float32),
            jax.ShapeDtypeStruct((num_tiles, Cout, 1), jnp.float32),
        ),
        grid=(num_tiles,),
        in_specs=[
            pl.BlockSpec((Cout, K), lambda j: (0, 0)),   # weights, constant block
            pl.BlockSpec((K, TM), lambda j: (0, j)),     # X^T tile
            pl.BlockSpec((Cout, 1), lambda j: (0, 0)),   # bias, constant block
        ],
        out_specs=(
            pl.BlockSpec((Cout, TM), lambda j: (0, j)),
            pl.BlockSpec((1, Cout, 1), lambda j: (j, 0, 0)),
            pl.BlockSpec((1, Cout, 1), lambda j: (j, 0, 0)),
        ),
        compiler_params=cparams,
    )(Wt, Xt, b2)

    # ---- per-channel finalize (tiny, stays in JAX) ----
    total = jnp.sum(part_sum, axis=0)[:, 0]              # [Cout]
    total_sq = jnp.sum(part_sq, axis=0)[:, 0]            # [Cout]
    mean = total / M
    var = jnp.maximum(total_sq / M - mean * mean, 0.0)   # biased variance
    scale = gamma.astype(jnp.float32) * lax.rsqrt(var + EPS)
    shift = beta.astype(jnp.float32) - mean * scale

    # ---- pass 2: normalize + affine (lane-dense fused multiply-add) ----
    o_t = pl.pallas_call(
        _bn_apply_kernel,
        out_shape=jax.ShapeDtypeStruct((Cout, M_pad), jnp.float32),
        grid=(num_tiles,),
        in_specs=[
            pl.BlockSpec((Cout, TM), lambda j: (0, j)),
            pl.BlockSpec((Cout, 1), lambda j: (0, 0)),
            pl.BlockSpec((Cout, 1), lambda j: (0, 0)),
        ],
        out_specs=pl.BlockSpec((Cout, TM), lambda j: (0, j)),
        compiler_params=cparams,
    )(y_full, scale.reshape(Cout, 1), shift.reshape(Cout, 1))

    # back to NCHW
    return o_t[:, :M].reshape(Cout, N, Ho, Wo).transpose(1, 0, 2, 3)


def encoder_block_reference(x, w, b, gamma, beta, *, match_bf16=True):
    # Reference with the same bf16-cast conv inputs (kernel uses bf16 MXU
    # inputs with f32 accumulation); bias/ReLU/BN in f32.
    if match_bf16:
        xr = x.astype(jnp.bfloat16).astype(jnp.float32)
        wr = w.astype(jnp.bfloat16).astype(jnp.float32)
    else:
        xr, wr = x, w
    y = lax.conv_general_dilated(
        xr, wr, window_strides=(2, 2), padding=((1, 1), (1, 1)),
        dimension_numbers=("NCHW", "OIHW", "NCHW"))
    y = y + b[None, :, None, None]
    y = jnp.maximum(y, 0.0)
    mean = jnp.mean(y, axis=(0, 2, 3), keepdims=True)
    var = jnp.mean((y - mean) ** 2, axis=(0, 2, 3), keepdims=True)
    yn = (y - mean) * lax.rsqrt(var + EPS)
    return yn * gamma[None, :, None, None] + beta[None, :, None, None]


if __name__ == "__main__":
    key = jax.random.PRNGKey(0)
    kx, kw, kb = jax.random.split(key, 3)

    N, Cin, H, W = 2, 4, 16, 16
    Cout, KH, KW = 8, 4, 4

    x = jax.random.normal(kx, (N, Cin, H, W), dtype=jnp.float32)
    fan_in = Cin * KH * KW
    w = jax.random.normal(kw, (Cout, Cin, KH, KW), dtype=jnp.float32) / jnp.sqrt(fan_in)
    b = jax.random.normal(kb, (Cout,), dtype=jnp.float32) * 0.1
    gamma = jnp.ones((Cout,), dtype=jnp.float32)   # nn.BatchNorm2d default
    beta = jnp.zeros((Cout,), dtype=jnp.float32)   # nn.BatchNorm2d default

    out = jax.block_until_ready(encoder_block_forward(x, w, b, gamma, beta))
    assert out.shape == (N, Cout, H // 2, W // 2), out.shape

    ref = encoder_block_reference(x, w, b, gamma, beta, match_bf16=True)
    max_err = float(jnp.max(jnp.abs(out - ref)))
    assert jnp.allclose(out, ref, atol=5e-3, rtol=5e-3), max_err

    print("KERNEL_OK")
</pallas_src>

<mosaic_0001>
module attributes {stable_mosaic.version = 11 : i64} {
  func.func @_conv_relu_stats_kernel(%arg0: i32, %arg1: memref<8x64xbf16, #tpu.memory_space<vmem>>, %arg2: memref<64x128xbf16, #tpu.memory_space<vmem>>, %arg3: memref<8x1xf32, #tpu.memory_space<vmem>>, %arg4: memref<8x128xf32, #tpu.memory_space<vmem>>, %arg5: memref<1x8x1xf32, #tpu.memory_space<vmem>>, %arg6: memref<1x8x1xf32, #tpu.memory_space<vmem>>) attributes {dimension_semantics = [#tpu.dimension_semantics<parallel>], iteration_bounds = array<i64: 1>, scalar_prefetch = 0 : i64, scratch_operands = 0 : i64, tpu.core_type = #tpu.core_type<tc>, window_params = [{pipeline_mode = #tpu.pipeline_mode<synchronous>, transform_indices = @transform_0, window_bounds = array<i64: 8, 64>}, {transform_indices = @transform_1, window_bounds = array<i64: 64, 128>}, {pipeline_mode = #tpu.pipeline_mode<synchronous>, transform_indices = @transform_2, window_bounds = array<i64: 8, 1>}, {transform_indices = @transform_3, window_bounds = array<i64: 8, 128>}, {transform_indices = @transform_4, window_bounds = array<i64: 1, 8, 1>}, {transform_indices = @transform_5, window_bounds = array<i64: 1, 8, 1>}]} {
    %c0 = arith.constant 0 : index
    %c0_0 = arith.constant 0 : index
    %0 = vector.load %arg1[%c0, %c0_0] : memref<8x64xbf16, #tpu.memory_space<vmem>>, vector<8x64xbf16>
    %c0_1 = arith.constant 0 : index
    %c0_2 = arith.constant 0 : index
    %1 = vector.load %arg2[%c0_1, %c0_2] : memref<64x128xbf16, #tpu.memory_space<vmem>>, vector<64x128xbf16>
    %cst = arith.constant dense<0.000000e+00> : vector<8x128xf32>
    %2 = tpu.matmul %0, %1, %cst {dimension_numbers = #tpu.dot_dimension_numbers<[1], [0], [0], [1], [0, 0, 1, 1], [], []>} : vector<8x64xbf16>, vector<64x128xbf16>, vector<8x128xf32> -> vector<8x128xf32>
    %c0_3 = arith.constant 0 : index
    %c0_4 = arith.constant 0 : index
    %3 = vector.load %arg3[%c0_3, %c0_4] : memref<8x1xf32, #tpu.memory_space<vmem>>, vector<8x1xf32>
    %4 = vector.broadcast %3 : vector<8x1xf32> to vector<8x128xf32>
    %5 = arith.addf %2, %4 : vector<8x128xf32>
    %cst_5 = arith.constant 0.000000e+00 : f32
    %6 = vector.broadcast %cst_5 : f32 to vector<8x128xf32>
    %7 = arith.maximumf %5, %6 : vector<8x128xf32>
    %c0_6 = arith.constant 0 : index
    %c0_7 = arith.constant 0 : index
    %8 = vector.load %arg4[%c0_6, %c0_7] : memref<8x128xf32, #tpu.memory_space<vmem>>, vector<8x128xf32>
    tpu.vector_store %arg4[%c0_6, %c0_7], %7 {strides = array<i32>} : memref<8x128xf32, #tpu.memory_space<vmem>>, vector<8x128xf32>,
    %cst_8 = arith.constant dense<0.000000e+00> : vector<8xf32>
    %9 = vector.multi_reduction <add>, %7, %cst_8 [1] : vector<8x128xf32> to vector<8xf32>
    %10 = vector.shape_cast %9 : vector<8xf32> to vector<8x1xf32>
    %c0_9 = arith.constant 0 : index
    %c0_10 = arith.constant 0 : index
    %c0_11 = arith.constant 0 : index
    %11 = vector.load %arg5[%c0_9, %c0_10, %c0_11] : memref<1x8x1xf32, #tpu.memory_space<vmem>>, vector<1x8x1xf32>
    %12 = vector.shape_cast %11 : vector<1x8x1xf32> to vector<8x1xf32>
    %13 = vector.shape_cast %10 : vector<8x1xf32> to vector<1x8x1xf32>
    tpu.vector_store %arg5[%c0_9, %c0_10, %c0_11], %13 {strides = array<i32>} : memref<1x8x1xf32, #tpu.memory_space<vmem>>, vector<1x8x1xf32>,
    %14 = arith.mulf %7, %7 : vector<8x128xf32>
    %cst_12 = arith.constant dense<0.000000e+00> : vector<8xf32>
    %15 = vector.multi_reduction <add>, %14, %cst_12 [1] : vector<8x128xf32> to vector<8xf32>
    %16 = vector.shape_cast %15 : vector<8xf32> to vector<8x1xf32>
    %c0_13 = arith.constant 0 : index
    %c0_14 = arith.constant 0 : index
    %c0_15 = arith.constant 0 : index
    %17 = vector.load %arg6[%c0_13, %c0_14, %c0_15] : memref<1x8x1xf32, #tpu.memory_space<vmem>>, vector<1x8x1xf32>
    %18 = vector.shape_cast %17 : vector<1x8x1xf32> to vector<8x1xf32>
    %19 = vector.shape_cast %16 : vector<8x1xf32> to vector<1x8x1xf32>
    tpu.vector_store %arg6[%c0_13, %c0_14, %c0_15], %19 {strides = array<i32>} : memref<1x8x1xf32, #tpu.memory_space<vmem>>, vector<1x8x1xf32>,
    return
  }
  func.func @transform_0(%arg0: i32) -> (i32, i32) {
    %c0_i32 = arith.constant 0 : i32
    %c0_i32_0 = arith.constant 0 : i32
    %c0_i32_1 = arith.constant 0 : i32
    return %c0_i32, %c0_i32_0 : i32, i32
  }
  func.func @transform_1(%arg0: i32) -> (i32, i32) {
    %c0_i32 = arith.constant 0 : i32
    %c0_i32_0 = arith.constant 0 : i32
    return %c0_i32, %arg0 : i32, i32
  }
  func.func @transform_2(%arg0: i32) -> (i32, i32) {
    %c0_i32 = arith.constant 0 : i32
    %c0_i32_0 = arith.constant 0 : i32
    %c0_i32_1 = arith.constant 0 : i32
    return %c0_i32, %c0_i32_0 : i32, i32
  }
  func.func @transform_3(%arg0: i32) -> (i32, i32) {
    %c0_i32 = arith.constant 0 : i32
    %c0_i32_0 = arith.constant 0 : i32
    return %c0_i32, %arg0 : i32, i32
  }
  func.func @transform_4(%arg0: i32) -> (i32, i32, i32) {
    %c0_i32 = arith.constant 0 : i32
    %c0_i32_0 = arith.constant 0 : i32
    %c0_i32_1 = arith.constant 0 : i32
    return %arg0, %c0_i32, %c0_i32_0 : i32, i32, i32
  }
  func.func @transform_5(%arg0: i32) -> (i32, i32, i32) {
    %c0_i32 = arith.constant 0 : i32
    %c0_i32_0 = arith.constant 0 : i32
    %c0_i32_1 = arith.constant 0 : i32
    return %arg0, %c0_i32, %c0_i32_0 : i32, i32, i32
  }
}

</mosaic_0001>

<llo_original>
// kernel: tpu_custom_call.1
$region0: #{tpu_custom_call.1}
  #allocation0 [shape = 'u32[]', space=smem, size = 0x4, offset = 0x4, fixed_abs, tag = 'smem constant byte address 0x4 - core index']
  #allocation1 [shape = 'u32[144,128]{1,0:T(1,128)}', space=vmem, size = 0x12000, scoped, tag = 'internal scratch']
  %s0 = inlined_call_operand.vmem [shape: bf16[8,64], index: 0, kind: input, shape index: {}]
  %s1 = inlined_call_operand.hbm [shape: bf16[64,128], index: 1, kind: input, shape index: {}]
  %s2 = inlined_call_operand.vmem [shape: f32[8,1], index: 2, kind: input, shape index: {}]
  %s3 = inlined_call_operand.hbm [shape: f32[8,128], index: 3, kind: output, shape index: {0}]
  %s4 = inlined_call_operand.vmem [shape: f32[1,8,1], index: 4, kind: output, shape index: {1}]
  %s5 = inlined_call_operand.vmem [shape: f32[1,8,1], index: 5, kind: output, shape index: {2}]
  %6 = xla_tuple %s3, %s4, %s5
  %s7 = sld [smem:[#allocation0]]
  $region42: #{tpu_custom_call.1} parent=0
    _
  %s9 = ssub.s32 1, %s7
  %s10 = scalar_select 0, %s9, %s7
  $region1: #{tpu_custom_call.1} parent=0
    #allocation2 [shape = 'u8[16384]{0}', space=vmem, size = 0x4000, scoped, tag = 'input window, operand 1, single buffered']
    #allocation3 [shape = 's32[1]{0}', space=sflag, size = 0x4, scoped, tag = 'scoped memory for tpu_custom_call.1']
    #allocation4 [shape = 's32[1]{0}', space=sflag, size = 0x4, scoped, tag = 'scoped memory for tpu_custom_call.1']
    #allocation5 [shape = 'u8[4096]{0}', space=vmem, size = 0x1000, scoped, tag = 'output window, operand 0, single buffered']
    %11 = vsyncpa [#allocation3], 0
    %12 = vsyncpa [#allocation4], 0
    // Predicated region
    $region2: #{tpu_custom_call.1} parent=1 // pred_check
      _
    $region3: #{tpu_custom_call.1} parent=1 // pred_check_branch
      %14 = sbr.rel (0) target = $region5
    $region4: #{tpu_custom_call.1} parent=1 // pred_region
      _
    $region5: #{tpu_custom_call.1} parent=1 // pred_fallthru
      _
    // Predicated region
    $region6: #{tpu_custom_call.1} parent=1 // pred_check
      _
    $region7: #{tpu_custom_call.1} parent=1 // pred_check_branch
      %16 = sbr.rel (0) target = $region9
    $region8: #{tpu_custom_call.1} parent=1 // pred_region
      %s18 = ssub.s32 512, 512
      %19 = vsyncadd [#allocation3], %s18
      %s20 = sshll.u32 [#allocation2], 4
      %s21 = int_to_ptr.vmem [resolvable:$true] %s20
      %26 = dma.hbm_to_vmem [thread:$0]  %s1, 512, %s21, [#allocation3], 64, 64, 4
    $region9: #{tpu_custom_call.1} parent=1 // pred_fallthru
      _
    // Predicated region
    $region10: #{tpu_custom_call.1} parent=1 // pred_check
      _
    $region11: #{tpu_custom_call.1} parent=1 // pred_check_branch
      %28 = sbr.rel (0) target = $region13
    $region12: #{tpu_custom_call.1} parent=1 // pred_region
      _
    $region13: #{tpu_custom_call.1} parent=1 // pred_fallthru
      _
    // Predicated region
    $region14: #{tpu_custom_call.1} parent=1 // pred_check
      _
    $region15: #{tpu_custom_call.1} parent=1 // pred_check_branch
      %30 = sbr.rel (0) target = $region17
    $region16: #{tpu_custom_call.1} parent=1 // pred_region
      %31 = dma.done [#allocation3], 512
    $region17: #{tpu_custom_call.1} parent=1 // pred_fallthru
      _
    %v33 = vld [vmem:[%s0] sm:$0xf]
    %v34 = vld [vmem:[#allocation2] sm:$0xf]
    %v35 = vld [vmem:[#allocation2 + $0x4] sm:$0xf]
    %v36 = vld [vmem:[#allocation2 + $0x8] sm:$0xf]
    %v37 = vld [vmem:[#allocation2 + $0xc] sm:$0xf]
    %v38 = vld [vmem:[#allocation2 + $0x10] sm:$0xf]
    %v39 = vld [vmem:[#allocation2 + $0x14] sm:$0xf]
    %v40 = vld [vmem:[#allocation2 + $0x18] sm:$0xf]
    %v41 = vld [vmem:[#allocation2 + $0x1c] sm:$0xf]
    %v42 = vld [vmem:[%s2] sm:$0xff]
    %44 = vset.pattern.permute.xlu0 0
    %45 = vperm.xlu0 %44, %v42
    %v46 = vpop.permute.xlu0 %45
    %v56 = vunpack.c.l.b16 %v34
    %v57 = vunpack.c.l.b16 %v35
    %v58 = vunpack.c.l.b16 %v36
    %v59 = vunpack.c.l.b16 %v37
    %v60 = vunpack.c.l.b16 %v38
    %v61 = vunpack.c.l.b16 %v39
    %v62 = vunpack.c.l.b16 %v40
    %v63 = vunpack.c.l.b16 %v41
    %v64 = vpack.c.b16 %v57, %v56
    %v65 = vpack.c.b16 %v59, %v58
    %v66 = vpack.c.b16 %v61, %v60
    %v67 = vpack.c.b16 %v63, %v62
    %vm72 = vcmask 523264
    %v74 = vsel %vm72, %v33, 0
    %76 = vmatprep.subr.bf16.mxu0 0
    %77 = vmatpush1.bf16.msra.mxu0 0
    %78 = vmatprep.subr.bf16.mxu0 0
    %79 = vmatpush1.bf16.msra.mxu0 0
    %80 = vmatprep.subr.bf16.mxu0 0
    %81 = vmatpush1.bf16.msra.mxu0 0
    %82 = vmatprep.subr.bf16.mxu0 0
    %83 = vmatpush1.bf16.msra.mxu0 0
    %84 = vmatprep.subr.bf16.mxu0 0
    %85 = vmatpush1.bf16.msra.mxu0 %v67
    %86 = vmatprep.subr.bf16.mxu0 0
    %87 = vmatpush1.bf16.msra.mxu0 %v66
    %88 = vmatprep.subr.bf16.mxu0 0
    %89 = vmatpush1.bf16.msra.mxu0 %v65
    %90 = vmatprep.subr.bf16.mxu0 0
    %91 = vmatpush1.bf16.msra.mxu0 %v64
    %92 = vmatprep.subr.bf16.mxu0 0
    %93 = vmatpush2.bf16.msra.mxu0 0
    %94 = vmatprep.subr.bf16.mxu0 0
    %95 = vmatpush2.bf16.msra.mxu0 0
    %96 = vmatprep.subr.bf16.mxu0 0
    %97 = vmatpush2.bf16.msra.mxu0 0
    %98 = vmatprep.subr.bf16.mxu0 0
    %99 = vmatpush2.bf16.msra.mxu0 0
    %100 = vmatprep.subr.bf16.mxu0 0
    %101 = vmatpush2.bf16.msra.mxu0 0
    %102 = vmatprep.subr.bf16.mxu0 0
    %103 = vmatpush2.bf16.msra.mxu0 0
    %104 = vmatprep.subr.bf16.mxu0 0
    %105 = vmatpush2.bf16.msra.mxu0 0
    %106 = vmatprep.subr.bf16.mxu0 0
    %107 = vmatpush2.bf16.msra.mxu0 0
    %108 = vmatprep.mubr.bf16.mxu0 0
    %109 = vmatmul.mubr.bf16.gmra.mxu0 %v74
    %v110 = vpop.f32.mrf.mxu0
    %v111 = vadd.f32 %v46, %v110
    %v112 = vpop.f32.mrf.mxu0
    %v113 = vpop.f32.mrf.mxu0
    %v114 = vpop.f32.mrf.mxu0
    %115 = vdwg.mxu0
    %v116 = vmax.f32 %v111, 0.0
    %117 = vst [vmem:[#allocation5] sm:$0xff] %v116
    %118 = vadd.xlane.f32.xlu0 %v116
    %v119 = vpop.xlane.xlu0 %118
    %vm120 = vcmask 7168
    %121 = vst.msk [vmem:[%s4] sm:$0xff] %vm120, %v119
    %v122 = vmul.f32 %v116, %v116
    %123 = vadd.xlane.f32.xlu0 %v122
    %v124 = vpop.xlane.xlu0 %123
    %125 = vst.msk [vmem:[%s5] sm:$0xff] %vm120, %v124
    // Predicated region
    $region18: #{tpu_custom_call.1} parent=1 // pred_check
      _
    $region19: #{tpu_custom_call.1} parent=1 // pred_check_branch
      %127 = sbr.rel (0) target = $region21
    $region20: #{tpu_custom_call.1} parent=1 // pred_region
      %s129 = ssub.s32 128, 128
      %130 = vsyncadd [#allocation4], %s129
      %s132 = sshll.u32 [#allocation5], 4
      %s133 = int_to_ptr.vmem [resolvable:$true] %s132
      %135 = dma.vmem_to_hbm [thread:$0]  %s133, 128, %s3, [#allocation4]
    $region21: #{tpu_custom_call.1} parent=1 // pred_fallthru
      _
    // Predicated region
    $region22: #{tpu_custom_call.1} parent=1 // pred_check
      _
    $region23: #{tpu_custom_call.1} parent=1 // pred_check_branch
      %137 = sbr.rel (0) target = $region25
    $region24: #{tpu_custom_call.1} parent=1 // pred_region
      _
    $region25: #{tpu_custom_call.1} parent=1 // pred_fallthru
      _
    // Predicated region
    $region26: #{tpu_custom_call.1} parent=1 // pred_check
      _
    $region27: #{tpu_custom_call.1} parent=1 // pred_check_branch
      %139 = sbr.rel (0) target = $region29
    $region28: #{tpu_custom_call.1} parent=1 // pred_region
      _
    $region29: #{tpu_custom_call.1} parent=1 // pred_fallthru
      _
    // Predicated region
    $region30: #{tpu_custom_call.1} parent=1 // pred_check
      _
    $region31: #{tpu_custom_call.1} parent=1 // pred_check_branch
      %141 = sbr.rel (0) target = $region33
    $region32: #{tpu_custom_call.1} parent=1 // pred_region
      %142 = dma.done [#allocation4], 128
    $region33: #{tpu_custom_call.1} parent=1 // pred_fallthru
      _
    // Predicated region
    $region34: #{tpu_custom_call.1} parent=1 // pred_check
      _
    $region35: #{tpu_custom_call.1} parent=1 // pred_check_branch
      %144 = sbr.rel (0) target = $region37
    $region36: #{tpu_custom_call.1} parent=1 // pred_region
      _
    $region37: #{tpu_custom_call.1} parent=1 // pred_fallthru
      _
    // Predicated region
    $region38: #{tpu_custom_call.1} parent=1 // pred_check
      _
    $region39: #{tpu_custom_call.1} parent=1 // pred_check_branch
      %146 = sbr.rel (0) target = $region41
    $region40: #{tpu_custom_call.1} parent=1 // pred_region
      _
    $region41: #{tpu_custom_call.1} parent=1 // pred_fallthru
      _
    %147 = vsyncpa [#allocation3], 1
    %148 = vsyncpa [#allocation4], 1

</llo_original>
